<compile_context>
chip_gen: v7x
topology: tpu7x:2x2x1
jax: 0.10.0
libtpu: 0.0.40
codegen_flags: <defaults>
</compile_context>

<pallas_src>
import functools

import jax
import jax.numpy as jnp
from jax.experimental import pallas as pl
from jax.experimental.pallas import tpu as pltpu


def _round_up(n, m):
    return ((n + m - 1) // m) * m


def _pick_tile(n, cap, candidates):
    for c in candidates:
        if c <= cap and n % c == 0:
            return c
    return n


# ----------------------- hoisted projection kernel ---------------------------
def _proj_kernel(x_ref, w_ref, attn_ref, feat_ref, scores_ref):
    # feat = x @ W_all (all heads fused, lane-dense), scores = feat @ block-diag attn
    feat = jnp.dot(x_ref[...], w_ref[...], preferred_element_type=jnp.float32)
    feat_ref[...] = feat
    scores_ref[...] = jnp.dot(feat, attn_ref[...], preferred_element_type=jnp.float32)


def _project(x_pad, w_all, attn_mat, *, block_rows=128):
    Np, Din = x_pad.shape
    W = w_all.shape[1]
    S = attn_mat.shape[1]
    grid = (Np // block_rows,)
    feat, scores = pl.pallas_call(
        _proj_kernel,
        out_shape=(jax.ShapeDtypeStruct((Np, W), jnp.float32),
                   jax.ShapeDtypeStruct((Np, S), jnp.float32)),
        grid_spec=pltpu.PrefetchScalarGridSpec(
            num_scalar_prefetch=0,
            grid=grid,
            in_specs=[
                pl.BlockSpec((block_rows, Din), lambda i: (i, 0)),
                pl.BlockSpec((Din, W), lambda i: (0, 0)),
                pl.BlockSpec((W, S), lambda i: (0, 0)),
            ],
            out_specs=[
                pl.BlockSpec((block_rows, W), lambda i: (i, 0)),
                pl.BlockSpec((block_rows, S), lambda i: (i, 0)),
            ],
        ),
        compiler_params=pltpu.CompilerParams(dimension_semantics=("parallel",)),
    )(x_pad, w_all, attn_mat)
    return feat, scores


# ----------------------- edge-softmax + aggregation kernel -------------------
def _gat_edge_kernel(er_m_ref, el_ref, feat_ref, adj_ref, *rest, heads, out_feats,
                     negative_slope, residual, apply_elu):
    H, F = heads, out_feats
    if residual:
        res_ref, out_ref, acc_ref, den_ref = rest
    else:
        out_ref, acc_ref, den_ref = rest

    @pl.when(pl.program_id(1) == 0)
    def _init():
        acc_ref[...] = jnp.zeros_like(acc_ref)
        den_ref[...] = jnp.zeros_like(den_ref)

    er_m = er_m_ref[...]                            # (bd, 2H): [er | m] per dst row
    feat_aug = feat_ref[...]                        # (bs, H*(F+1)) bf16: per-head [feat_h | 1]
    adj_f = adj_ref[...].astype(jnp.float32)        # int8 adjacency tile -> mask multiplier

    num_parts = []
    den_parts = []
    for h in range(H):                              # static unroll; H is small
        el = el_ref[h:h + 1, :]                     # (1, bs) src term (pre-transposed)
        er = er_m[:, h:h + 1]                       # (bd, 1) dst term
        m = er_m[:, H + h:H + h + 1]                # (bd, 1) stabilizer = lrelu(er + max el)
        z = er + el                                 # (bd, bs)
        z = jnp.maximum(z, negative_slope * z)      # leaky_relu (2 VPU ops)
        p = jnp.exp(z - m) * adj_f                  # masked, un-normalized softmax weights
        # numerator AND denominator in one MXU pass via the packed ones column
        agg = jnp.dot(p.astype(jnp.bfloat16),
                      feat_aug[:, h * (F + 1):(h + 1) * (F + 1)],
                      preferred_element_type=jnp.float32)     # (bd, F+1)
        num_parts.append(agg[:, :F])
        den_parts.append(agg[:, F:F + 1])

    acc_ref[...] += jnp.concatenate(num_parts, axis=-1)        # (bd, H*F) lane-dense
    den_ref[...] += jnp.concatenate(den_parts, axis=-1)        # (bd, H)

    @pl.when(pl.program_id(1) == pl.num_programs(1) - 1)
    def _finalize():
        inv = pl.reciprocal(jnp.maximum(den_ref[...], 1e-30), approx=True)   # (bd, H), EUP
        acc = acc_ref[...]
        pieces = []
        for h in range(H):
            rst = acc[:, h * F:(h + 1) * F] * inv[:, h:h + 1]
            if residual:
                rst = rst + res_ref[...][:, h * F:(h + 1) * F]
            if apply_elu:
                rst = jnp.where(rst > 0, rst, jnp.exp(jnp.minimum(rst, 0.0)) - 1.0)
            pieces.append(rst)
        out_ref[...] = jnp.concatenate(pieces, axis=-1).astype(out_ref.dtype)


# ------------------------------- wrapper -------------------------------------
def gat_conv(x, fc_w, attn_l, attn_r, adj, *, negative_slope, residual_w=None,
             apply_elu=True, block_dst=None, block_src=None):
    """GATConv forward. Returns lane-dense (N, H*out_feats), head-major last dim."""
    N, Din = x.shape
    H, _, F = fc_w.shape
    HF = H * F
    ns = float(negative_slope)

    # ---- pad N to a lane-friendly multiple of 128 (src axis & adjacency lanes) ----
    Np = _round_up(N, 128)
    x_pad = jnp.zeros((Np, Din), jnp.float32).at[:N].set(x.astype(jnp.float32))
    adj_i8 = jnp.zeros((Np, Np), jnp.int8).at[:N, :N].set((adj > 0).astype(jnp.int8))

    # ---- host-side weight packing (layout plumbing only) ----
    w_feat = jnp.transpose(fc_w, (1, 0, 2)).reshape(Din, HF).astype(jnp.float32)
    residual = residual_w is not None
    if residual:
        w_res = jnp.transpose(residual_w, (1, 0, 2)).reshape(Din, HF).astype(jnp.float32)
        w_all = jnp.concatenate([w_feat, w_res], axis=1)       # (Din, 2*H*F)
    else:
        w_all = w_feat

    # block-diagonal attention matrix: scores = feat_all @ attn_mat -> (N, 2H)
    al = attn_l.reshape(H, F).astype(jnp.float32)
    ar = attn_r.reshape(H, F).astype(jnp.float32)
    eyeh = jnp.eye(H, dtype=jnp.float32)
    a_l = jnp.einsum("hf,hg->hfg", al, eyeh).reshape(HF, H)
    a_r = jnp.einsum("hf,hg->hfg", ar, eyeh).reshape(HF, H)
    attn_mat = jnp.concatenate([a_l, a_r], axis=1)             # (H*F, 2H)
    if residual:  # zero rows so residual columns don't contribute to attention scores
        attn_mat = jnp.concatenate(
            [attn_mat, jnp.zeros((HF, 2 * H), jnp.float32)], axis=0)

    # ---- hoisted projection: once for all nodes (was recomputed per dst tile) ----
    proj, scores = _project(x_pad, w_all, attn_mat)
    feat = proj[:, :HF]
    res = proj[:, HF:] if residual else None

    el = scores[:, :H]                                         # (Np, H)
    er = scores[:, H:]                                         # (Np, H)
    el_t = jnp.transpose(el)                                   # (H, Np): one transpose total
    el_max = jnp.max(el[:N], axis=0, keepdims=True)            # (1, H) over real src rows
    z = er + el_max
    m = jnp.maximum(z, ns * z)                                 # monotone leaky_relu -> row max
    er_m = jnp.concatenate([er, m], axis=1)                    # (Np, 2H)

    # per-head [feat_h | 1] packing (bf16) -> one MXU pass yields numerator + denominator
    feat_aug = jnp.concatenate(
        [feat.astype(jnp.bfloat16).reshape(Np, H, F),
         jnp.ones((Np, H, 1), jnp.bfloat16)], axis=-1).reshape(Np, H * (F + 1))

    # ---- tile sizes: >=2 dst tiles (v7x megacore), bounded src tiles (VMEM) ----
    if block_dst is None:
        block_dst = _pick_tile(Np, min(256, Np // 2), (256, 128, 64, 32))
    if block_src is None:
        block_src = _pick_tile(Np, min(1024, Np), (1024, 512, 256, 128))
    assert Np % block_dst == 0 and Np % block_src == 0, (Np, block_dst, block_src)
    grid = (Np // block_dst, Np // block_src)

    kernel = functools.partial(
        _gat_edge_kernel, heads=H, out_feats=F, negative_slope=ns,
        residual=residual, apply_elu=apply_elu)

    in_specs = [
        pl.BlockSpec((block_dst, 2 * H), lambda i, j: (i, 0)),          # [er | m] dst tile
        pl.BlockSpec((H, block_src), lambda i, j: (0, j)),              # el^T src tile
        pl.BlockSpec((block_src, H * (F + 1)), lambda i, j: (j, 0)),    # [feat_h|1] src tile
        pl.BlockSpec((block_dst, block_src), lambda i, j: (i, j)),      # int8 adjacency tile
    ]
    inputs = [er_m, el_t, feat_aug, adj_i8]
    if residual:
        in_specs.append(pl.BlockSpec((block_dst, HF), lambda i, j: (i, 0)))
        inputs.append(res)

    out = pl.pallas_call(
        kernel,
        out_shape=jax.ShapeDtypeStruct((Np, HF), jnp.float32),
        grid_spec=pltpu.PrefetchScalarGridSpec(
            num_scalar_prefetch=0,
            grid=grid,
            in_specs=in_specs,
            out_specs=pl.BlockSpec((block_dst, HF), lambda i, j: (i, 0)),
            scratch_shapes=[pltpu.VMEM((block_dst, HF), jnp.float32),   # acc
                            pltpu.VMEM((block_dst, H), jnp.float32)],   # denom
        ),
        compiler_params=pltpu.CompilerParams(
            dimension_semantics=("parallel", "arbitrary"),
            vmem_limit_bytes=32 * 1024 * 1024,
        ),
    )(*inputs)

    return out[:N]                                             # (N, H*F), head-major


def gat_layer_forward(adj, x, layer_id, n_layers, params):
    """GATLayer.forward: mean over heads on the last layer, else flatten(1)."""
    h = gat_conv(
        x, params["fc_w"], params["attn_l"], params["attn_r"], adj,
        negative_slope=params["negative_slope"],
        residual_w=params.get("residual_w"),
        apply_elu=params["apply_elu"],
    )
    N = h.shape[0]
    H, _, F = params["fc_w"].shape
    if layer_id == n_layers - 1:
        return h.reshape(N, H, F).mean(axis=1)     # mean over heads
    return h                                       # already (N, H*F) == flatten(1)


# --------------------------- pure-JAX reference ------------------------------
def gat_conv_ref(x, fc_w, attn_l, attn_r, adj, negative_slope, residual_w,
                 apply_elu):
    feat = jnp.einsum("nd,hdf->hnf", x, fc_w)
    el = jnp.sum(feat * attn_l, axis=-1)                  # (H, N)
    er = jnp.sum(feat * attn_r, axis=-1)
    e = er[:, :, None] + el[:, None, :]                   # (H, dst, src)
    e = jnp.where(e > 0, e, negative_slope * e)
    mask = adj[None] > 0
    e = jnp.where(mask, e, -1e30)
    p = jnp.exp(e - jnp.max(e, axis=-1, keepdims=True))
    p = jnp.where(mask, p, 0.0)
    alpha = p / jnp.maximum(jnp.sum(p, axis=-1, keepdims=True), 1e-30)
    rst = jnp.einsum("hds,hsf->hdf", alpha, feat)
    if residual_w is not None:
        rst = rst + jnp.einsum("nd,hdf->hnf", x, residual_w)
    if apply_elu:
        rst = jnp.where(rst > 0, rst, jnp.exp(jnp.minimum(rst, 0.0)) - 1.0)
    return jnp.transpose(rst, (1, 0, 2))                  # (N, H, F)


# ---------------------------------- main -------------------------------------
if __name__ == "__main__":
    key = jax.random.PRNGKey(0)
    k_x, k_adj, k_w, k_al, k_ar = jax.random.split(key, 5)

    # Small GAT config (layerid=0: residual=False, activation=elu). H*F = 128 -> lane dense.
    N, in_feats, out_feats, H = 64, 32, 32, 4
    negative_slope = 0.2
    n_layers = 3
    # TODO(synk): feat_drop / attn_drop (0.6 in training) are dropout layers;
    # implemented as identity (eval-mode semantics).

    x = jax.random.normal(k_x, (N, in_feats), dtype=jnp.float32)

    # random sparse adjacency + self loops (standard GAT preprocessing)
    adj = (jax.random.uniform(k_adj, (N, N)) < 0.15).astype(jnp.float32)
    adj = jnp.maximum(adj, jnp.eye(N, dtype=jnp.float32))

    scale = 1.0 / jnp.sqrt(jnp.float32(in_feats))
    params = {
        "fc_w": jax.random.normal(k_w, (H, in_feats, out_feats), jnp.float32) * scale,
        "attn_l": jax.random.normal(k_al, (H, 1, out_feats), jnp.float32) * 0.1,
        "attn_r": jax.random.normal(k_ar, (H, 1, out_feats), jnp.float32) * 0.1,
        "negative_slope": negative_slope,
        "apply_elu": True,             # GATLayer passes activation for non-last layers
        # "residual_w": ...            # residual=False for layerid == 0
    }

    # intermediate layer -> flatten(1)
    out = gat_layer_forward(adj, x, 0, n_layers, params)
    out = jax.block_until_ready(out)
    assert out.shape == (N, H * out_feats), out.shape

    # correctness vs pure-f32 reference (tolerance covers bf16 aggregation weights +
    # approx reciprocal; structural errors would be O(0.1-1))
    ref = gat_conv_ref(x, params["fc_w"], params["attn_l"], params["attn_r"],
                       adj, negative_slope, None, True)
    ref_flat = ref.reshape(N, -1)
    max_err = float(jnp.max(jnp.abs(out - ref_flat)))
    assert jnp.allclose(out, ref_flat, rtol=2e-2, atol=2e-2), max_err

    # last layer path: mean over heads, no activation in GATConv
    params_last = dict(params, apply_elu=False)
    out_last = gat_layer_forward(adj, x, n_layers - 1, n_layers, params_last)
    out_last = jax.block_until_ready(out_last)
    assert out_last.shape == (N, out_feats), out_last.shape
    ref_last = gat_conv_ref(x, params["fc_w"], params["attn_l"], params["attn_r"],
                            adj, negative_slope, None, False).mean(axis=1)
    max_err_last = float(jnp.max(jnp.abs(out_last - ref_last)))
    assert jnp.allclose(out_last, ref_last, rtol=2e-2, atol=2e-2), max_err_last

    print("KERNEL_OK")
</pallas_src>

<mosaic_0001>
module attributes {stable_mosaic.version = 11 : i64} {
  func.func @_proj_kernel(%arg0: i32, %arg1: memref<128x32xf32, #tpu.memory_space<vmem>>, %arg2: memref<32x128xf32, #tpu.memory_space<vmem>>, %arg3: memref<128x8xf32, #tpu.memory_space<vmem>>, %arg4: memref<128x128xf32, #tpu.memory_space<vmem>>, %arg5: memref<128x8xf32, #tpu.memory_space<vmem>>) attributes {dimension_semantics = [#tpu.dimension_semantics<parallel>], iteration_bounds = array<i64: 1>, scalar_prefetch = 0 : i64, scratch_operands = 0 : i64, tpu.core_type = #tpu.core_type<tc>, window_params = [{transform_indices = @transform_0, window_bounds = array<i64: 128, 32>}, {pipeline_mode = #tpu.pipeline_mode<synchronous>, transform_indices = @transform_1, window_bounds = array<i64: 32, 128>}, {pipeline_mode = #tpu.pipeline_mode<synchronous>, transform_indices = @transform_2, window_bounds = array<i64: 128, 8>}, {transform_indices = @transform_3, window_bounds = array<i64: 128, 128>}, {transform_indices = @transform_4, window_bounds = array<i64: 128, 8>}]} {
    %c0 = arith.constant 0 : index
    %c0_0 = arith.constant 0 : index
    %0 = vector.load %arg1[%c0, %c0_0] : memref<128x32xf32, #tpu.memory_space<vmem>>, vector<128x32xf32>
    %c0_1 = arith.constant 0 : index
    %c0_2 = arith.constant 0 : index
    %1 = vector.load %arg2[%c0_1, %c0_2] : memref<32x128xf32, #tpu.memory_space<vmem>>, vector<32x128xf32>
    %cst = arith.constant dense<0.000000e+00> : vector<128x128xf32>
    %2 = tpu.matmul %0, %1, %cst {dimension_numbers = #tpu.dot_dimension_numbers<[1], [0], [0], [1], [0, 0, 1, 1], [], []>} : vector<128x32xf32>, vector<32x128xf32>, vector<128x128xf32> -> vector<128x128xf32>
    %c0_3 = arith.constant 0 : index
    %c0_4 = arith.constant 0 : index
    %3 = vector.load %arg4[%c0_3, %c0_4] : memref<128x128xf32, #tpu.memory_space<vmem>>, vector<128x128xf32>
    tpu.vector_store %arg4[%c0_3, %c0_4], %2 {strides = array<i32>} : memref<128x128xf32, #tpu.memory_space<vmem>>, vector<128x128xf32>,
    %c0_5 = arith.constant 0 : index
    %c0_6 = arith.constant 0 : index
    %4 = vector.load %arg3[%c0_5, %c0_6] : memref<128x8xf32, #tpu.memory_space<vmem>>, vector<128x8xf32>
    %cst_7 = arith.constant dense<0.000000e+00> : vector<128x8xf32>
    %5 = tpu.matmul %2, %4, %cst_7 {dimension_numbers = #tpu.dot_dimension_numbers<[1], [0], [0], [1], [0, 0, 1, 1], [], []>} : vector<128x128xf32>, vector<128x8xf32>, vector<128x8xf32> -> vector<128x8xf32>
    %c0_8 = arith.constant 0 : index
    %c0_9 = arith.constant 0 : index
    %6 = vector.load %arg5[%c0_8, %c0_9] : memref<128x8xf32, #tpu.memory_space<vmem>>, vector<128x8xf32>
    tpu.vector_store %arg5[%c0_8, %c0_9], %5 {strides = array<i32>} : memref<128x8xf32, #tpu.memory_space<vmem>>, vector<128x8xf32>,
    return
  }
  func.func @transform_0(%arg0: i32) -> (i32, i32) {
    %c0_i32 = arith.constant 0 : i32
    %c0_i32_0 = arith.constant 0 : i32
    return %arg0, %c0_i32 : i32, i32
  }
  func.func @transform_1(%arg0: i32) -> (i32, i32) {
    %c0_i32 = arith.constant 0 : i32
    %c0_i32_0 = arith.constant 0 : i32
    %c0_i32_1 = arith.constant 0 : i32
    return %c0_i32, %c0_i32_0 : i32, i32
  }
  func.func @transform_2(%arg0: i32) -> (i32, i32) {
    %c0_i32 = arith.constant 0 : i32
    %c0_i32_0 = arith.constant 0 : i32
    %c0_i32_1 = arith.constant 0 : i32
    return %c0_i32, %c0_i32_0 : i32, i32
  }
  func.func @transform_3(%arg0: i32) -> (i32, i32) {
    %c0_i32 = arith.constant 0 : i32
    %c0_i32_0 = arith.constant 0 : i32
    return %arg0, %c0_i32 : i32, i32
  }
  func.func @transform_4(%arg0: i32) -> (i32, i32) {
    %c0_i32 = arith.constant 0 : i32
    %c0_i32_0 = arith.constant 0 : i32
    return %arg0, %c0_i32 : i32, i32
  }
}

</mosaic_0001>

<llo_original>
// kernel: tpu_custom_call.1
$region0: #{tpu_custom_call.1}
  #allocation0 [shape = 'u32[]', space=smem, size = 0x4, offset = 0x4, fixed_abs, tag = 'smem constant byte address 0x4 - core index']
  #allocation1 [shape = 'u32[144,128]{1,0:T(1,128)}', space=vmem, size = 0x12000, scoped, tag = 'internal scratch']
  %s0 = inlined_call_operand.vmem [shape: f32[128,32], index: 0, kind: input, shape index: {}]
  %s1 = inlined_call_operand.vmem [shape: f32[32,128], index: 1, kind: input, shape index: {}]
  %s2 = inlined_call_operand.vmem [shape: f32[128,8], index: 2, kind: input, shape index: {}]
  %s3 = inlined_call_operand.hbm [shape: f32[128,128], index: 3, kind: output, shape index: {0}]
  %s4 = inlined_call_operand.vmem [shape: f32[128,8], index: 4, kind: output, shape index: {1}]
  %5 = xla_tuple %s3, %s4
  %s6 = sld [smem:[#allocation0]]
  $region30: #{tpu_custom_call.1} parent=0
    _
  %s8 = ssub.s32 1, %s6
  %s9 = scalar_select 0, %s8, %s6
  $region1: #{tpu_custom_call.1} parent=0
    #allocation2 [shape = 'u8[65536]{0}', space=vmem, size = 0x10000, scoped, tag = 'output window, operand 0, single buffered']
    #allocation3 [shape = 's32[1]{0}', space=sflag, size = 0x4, scoped, tag = 'scoped memory for tpu_custom_call.1']
    %10 = vsyncpa [#allocation3], 0
    // Predicated region
    $region2: #{tpu_custom_call.1} parent=1 // pred_check
      _
    $region3: #{tpu_custom_call.1} parent=1 // pred_check_branch
      %12 = sbr.rel (0) target = $region5
    $region4: #{tpu_custom_call.1} parent=1 // pred_region
      _
    $region5: #{tpu_custom_call.1} parent=1 // pred_fallthru
      _
    // Predicated region
    $region6: #{tpu_custom_call.1} parent=1 // pred_check
      _
    $region7: #{tpu_custom_call.1} parent=1 // pred_check_branch
      %14 = sbr.rel (0) target = $region9
    $region8: #{tpu_custom_call.1} parent=1 // pred_region
      _
    $region9: #{tpu_custom_call.1} parent=1 // pred_fallthru
      _
    // Predicated region
    $region10: #{tpu_custom_call.1} parent=1 // pred_check
      _
    $region11: #{tpu_custom_call.1} parent=1 // pred_check_branch
      %16 = sbr.rel (0) target = $region13
    $region12: #{tpu_custom_call.1} parent=1 // pred_region
      _
    $region13: #{tpu_custom_call.1} parent=1 // pred_fallthru
      _
    %v17 = vld [vmem:[%s0] sm:$0xff]
    %v18 = vld [vmem:[%s0 + $0x8] sm:$0xff]
    %v19 = vld [vmem:[%s0 + $0x10] sm:$0xff]
    %v20 = vld [vmem:[%s0 + $0x18] sm:$0xff]
    %v21 = vld [vmem:[%s0 + $0x20] sm:$0xff]
    %v22 = vld [vmem:[%s0 + $0x28] sm:$0xff]
    %v23 = vld [vmem:[%s0 + $0x30] sm:$0xff]
    %v24 = vld [vmem:[%s0 + $0x38] sm:$0xff]
    %v25 = vld [vmem:[%s0 + $0x40] sm:$0xff]
    %v26 = vld [vmem:[%s0 + $0x48] sm:$0xff]
    %v27 = vld [vmem:[%s0 + $0x50] sm:$0xff]
    %v28 = vld [vmem:[%s0 + $0x58] sm:$0xff]
    %v29 = vld [vmem:[%s0 + $0x60] sm:$0xff]
    %v30 = vld [vmem:[%s0 + $0x68] sm:$0xff]
    %v31 = vld [vmem:[%s0 + $0x70] sm:$0xff]
    %v32 = vld [vmem:[%s0 + $0x78] sm:$0xff]
    %v33 = vld [vmem:[%s1] sm:$0xff]
    %v34 = vld [vmem:[%s1 + $0x8] sm:$0xff]
    %v35 = vld [vmem:[%s1 + $0x10] sm:$0xff]
    %v36 = vld [vmem:[%s1 + $0x18] sm:$0xff]
    %vm37 = vcmask 261120
    %v39 = vsel %vm37, %v17, 0
    %v42 = vsel %vm37, %v18, 0
    %v45 = vsel %vm37, %v19, 0
    %v48 = vsel %vm37, %v20, 0
    %v51 = vsel %vm37, %v21, 0
    %v54 = vsel %vm37, %v22, 0
    %v57 = vsel %vm37, %v23, 0
    %v60 = vsel %vm37, %v24, 0
    %v63 = vsel %vm37, %v25, 0
    %v66 = vsel %vm37, %v26, 0
    %v69 = vsel %vm37, %v27, 0
    %v72 = vsel %vm37, %v28, 0
    %v75 = vsel %vm37, %v29, 0
    %v78 = vsel %vm37, %v30, 0
    %v81 = vsel %vm37, %v31, 0
    %v84 = vsel %vm37, %v32, 0
    %86 = vmatprep.subr.mxu0 0.0
    %87 = vmatpush1.msra.mxu0 %v33
    %88 = vmatprep.subr.mxu0 0.0
    %89 = vmatpush1.msra.mxu0 %v34
    %90 = vmatprep.subr.mxu0 0.0
    %91 = vmatpush1.msra.mxu0 %v35
    %92 = vmatprep.subr.mxu0 0.0
    %93 = vmatpush1.msra.mxu0 %v36
    %94 = vmatprep.subr.mxu0 0.0
    %95 = vmatpush1.msra.mxu0 0.0
    %96 = vmatprep.subr.mxu0 0.0
    %97 = vmatpush1.msra.mxu0 0.0
    %98 = vmatprep.subr.mxu0 0.0
    %99 = vmatpush1.msra.mxu0 0.0
    %100 = vmatprep.subr.mxu0 0.0
    %101 = vmatpush1.msra.mxu0 0.0
    %102 = vmatprep.subr.mxu0 0.0
    %103 = vmatpush1.msra.mxu0 0.0
    %104 = vmatprep.subr.mxu0 0.0
    %105 = vmatpush1.msra.mxu0 0.0
    %106 = vmatprep.subr.mxu0 0.0
    %107 = vmatpush1.msra.mxu0 0.0
    %108 = vmatprep.subr.mxu0 0.0
    %109 = vmatpush1.msra.mxu0 0.0
    %110 = vmatprep.subr.mxu0 0.0
    %111 = vmatpush1.msra.mxu0 0.0
    %112 = vmatprep.subr.mxu0 0.0
    %113 = vmatpush1.msra.mxu0 0.0
    %114 = vmatprep.subr.mxu0 0.0
    %115 = vmatpush1.msra.mxu0 0.0
    %116 = vmatprep.subr.mxu0 0.0
    %117 = vmatpush1.msra.mxu0 0.0
    %118 = vmatprep.subr.mxu0 0.0
    %119 = vmatpush1.msra.mxu0 0.0
    %120 = vmatprep.subr.mxu0 0.0
    %121 = vmatpush1.msra.mxu0 0.0
    %122 = vmatprep.subr.mxu0 0.0
    %123 = vmatpush1.msra.mxu0 0.0
    %124 = vmatprep.subr.mxu0 0.0
    %125 = vmatpush1.msra.mxu0 0.0
    %126 = vmatprep.subr.mxu0 0.0
    %127 = vmatpush1.msra.mxu0 0.0
    %128 = vmatprep.subr.mxu0 0.0
    %129 = vmatpush1.msra.mxu0 0.0
    %130 = vmatprep.subr.mxu0 0.0
    %131 = vmatpush1.msra.mxu0 0.0
    %132 = vmatprep.subr.mxu0 0.0
    %133 = vmatpush1.msra.mxu0 0.0
    %134 = vmatprep.subr.mxu0 0.0
    %135 = vmatpush1.msra.mxu0 0.0
    %136 = vmatprep.subr.mxu0 0.0
    %137 = vmatpush1.msra.mxu0 0.0
    %138 = vmatprep.subr.mxu0 0.0
    %139 = vmatpush1.msra.mxu0 0.0
    %140 = vmatprep.subr.mxu0 0.0
    %141 = vmatpush1.msra.mxu0 0.0
    %142 = vmatprep.subr.mxu0 0.0
    %143 = vmatpush1.msra.mxu0 0.0
    %144 = vmatprep.subr.mxu0 0.0
    %145 = vmatpush1.msra.mxu0 0.0
    %146 = vmatprep.subr.mxu0 0.0
    %147 = vmatpush1.msra.mxu0 0.0
    %148 = vmatprep.subr.mxu0 0.0
    %149 = vmatpush1.msra.mxu0 0.0
    %150 = vmatprep.mubr.f32.mxu0 0.0
    %151 = vmatmul.mubr.f32.gmra.mrb[0].mxu0 %v39
    %v152 = vpop.f32.mrb[0].mxu0
    %v153 = vadd.f32 0.0, %v152
    %v154 = vpop.f32.mrb[0].mxu0
    %155 = vmatprep.mubr.f32.mxu0 0.0
    %156 = vmatmul.mubr.f32.gmra.mrb[0].mxu0 %v42
    %v157 = vpop.f32.mrb[0].mxu0
    %v158 = vadd.f32 0.0, %v157
    %v159 = vpop.f32.mrb[0].mxu0
    %160 = vmatprep.mubr.f32.mxu0 0.0
    %161 = vmatmul.mubr.f32.gmra.mrb[0].mxu0 %v45
    %v162 = vpop.f32.mrb[0].mxu0
    %v163 = vadd.f32 0.0, %v162
    %v164 = vpop.f32.mrb[0].mxu0
    %165 = vmatprep.mubr.f32.mxu0 0.0
    %166 = vmatmul.mubr.f32.gmra.mrb[0].mxu0 %v48
    %v167 = vpop.f32.mrb[0].mxu0
    %v168 = vadd.f32 0.0, %v167
    %v169 = vpop.f32.mrb[0].mxu0
    %170 = vmatprep.mubr.f32.mxu0 0.0
    %171 = vmatmul.mubr.f32.gmra.mrb[0].mxu0 %v51
    %v172 = vpop.f32.mrb[0].mxu0
    %v173 = vadd.f32 0.0, %v172
    %v174 = vpop.f32.mrb[0].mxu0
    %175 = vmatprep.mubr.f32.mxu0 0.0
    %176 = vmatmul.mubr.f32.gmra.mrb[0].mxu0 %v54
    %v177 = vpop.f32.mrb[0].mxu0
    %v178 = vadd.f32 0.0, %v177
    %v179 = vpop.f32.mrb[0].mxu0
    %180 = vmatprep.mubr.f32.mxu0 0.0
    %181 = vmatmul.mubr.f32.gmra.mrb[0].mxu0 %v57
    %v182 = vpop.f32.mrb[0].mxu0
    %v183 = vadd.f32 0.0, %v182
    %v184 = vpop.f32.mrb[0].mxu0
    %185 = vmatprep.mubr.f32.mxu0 0.0
    %186 = vmatmul.mubr.f32.gmra.mrb[0].mxu0 %v60
    %v187 = vpop.f32.mrb[0].mxu0
    %v188 = vadd.f32 0.0, %v187
    %v189 = vpop.f32.mrb[0].mxu0
    %190 = vmatprep.mubr.f32.mxu0 0.0
    %191 = vmatmul.mubr.f32.gmra.mrb[0].mxu0 %v63
    %v192 = vpop.f32.mrb[0].mxu0
    %v193 = vadd.f32 0.0, %v192
    %v194 = vpop.f32.mrb[0].mxu0
    %195 = vmatprep.mubr.f32.mxu0 0.0
    %196 = vmatmul.mubr.f32.gmra.mrb[0].mxu0 %v66
    %v197 = vpop.f32.mrb[0].mxu0
    %v198 = vadd.f32 0.0, %v197
    %v199 = vpop.f32.mrb[0].mxu0
    %200 = vmatprep.mubr.f32.mxu0 0.0
    %201 = vmatmul.mubr.f32.gmra.mrb[0].mxu0 %v69
    %v202 = vpop.f32.mrb[0].mxu0
    %v203 = vadd.f32 0.0, %v202
    %v204 = vpop.f32.mrb[0].mxu0
    %205 = vmatprep.mubr.f32.mxu0 0.0
    %206 = vmatmul.mubr.f32.gmra.mrb[0].mxu0 %v72
    %v207 = vpop.f32.mrb[0].mxu0
    %v208 = vadd.f32 0.0, %v207
    %v209 = vpop.f32.mrb[0].mxu0
    %210 = vmatprep.mubr.f32.mxu0 0.0
    %211 = vmatmul.mubr.f32.gmra.mrb[0].mxu0 %v75
    %v212 = vpop.f32.mrb[0].mxu0
    %v213 = vadd.f32 0.0, %v212
    %v214 = vpop.f32.mrb[0].mxu0
    %215 = vmatprep.mubr.f32.mxu0 0.0
    %216 = vmatmul.mubr.f32.gmra.mrb[0].mxu0 %v78
    %v217 = vpop.f32.mrb[0].mxu0
    %v218 = vadd.f32 0.0, %v217
    %v219 = vpop.f32.mrb[0].mxu0
    %220 = vmatprep.mubr.f32.mxu0 0.0
    %221 = vmatmul.mubr.f32.gmra.mrb[0].mxu0 %v81
    %v222 = vpop.f32.mrb[0].mxu0
    %v223 = vadd.f32 0.0, %v222
    %v224 = vpop.f32.mrb[0].mxu0
    %225 = vmatprep.mubr.f32.mxu0 0.0
    %226 = vmatmul.mubr.f32.gmra.mrb[0].mxu0 %v84
    %v227 = vpop.f32.mrb[0].mxu0
    %v228 = vadd.f32 0.0, %v227
    %v229 = vpop.f32.mrb[0].mxu0
    %230 = vdwg.mxu0
    %231 = vst [vmem:[#allocation2] sm:$0xff] %v153
    %232 = vst [vmem:[#allocation2 + $0x8] sm:$0xff] %v158
    %233 = vst [vmem:[#allocation2 + $0x10] sm:$0xff] %v163
    %234 = vst [vmem:[#allocation2 + $0x18] sm:$0xff] %v168
    %235 = vst [vmem:[#allocation2 + $0x20] sm:$0xff] %v173
    %236 = vst [vmem:[#allocation2 + $0x28] sm:$0xff] %v178
    %237 = vst [vmem:[#allocation2 + $0x30] sm:$0xff] %v183
    %238 = vst [vmem:[#allocation2 + $0x38] sm:$0xff] %v188
    %239 = vst [vmem:[#allocation2 + $0x40] sm:$0xff] %v193
    %240 = vst [vmem:[#allocation2 + $0x48] sm:$0xff] %v198
    %241 = vst [vmem:[#allocation2 + $0x50] sm:$0xff] %v203
    %242 = vst [vmem:[#allocation2 + $0x58] sm:$0xff] %v208
    %243 = vst [vmem:[#allocation2 + $0x60] sm:$0xff] %v213
    %244 = vst [vmem:[#allocation2 + $0x68] sm:$0xff] %v218
    %245 = vst [vmem:[#allocation2 + $0x70] sm:$0xff] %v223
    %246 = vst [vmem:[#allocation2 + $0x78] sm:$0xff] %v228
    %v247 = vld [vmem:[%s2] sm:$0xff]
    %v248 = vld [vmem:[%s2 + $0x8] sm:$0xff]
    %v249 = vld [vmem:[%s2 + $0x10] sm:$0xff]
    %v250 = vld [vmem:[%s2 + $0x18] sm:$0xff]
    %v251 = vld [vmem:[%s2 + $0x20] sm:$0xff]
    %v252 = vld [vmem:[%s2 + $0x28] sm:$0xff]
    %v253 = vld [vmem:[%s2 + $0x30] sm:$0xff]
    %v254 = vld [vmem:[%s2 + $0x38] sm:$0xff]
    %v255 = vld [vmem:[%s2 + $0x40] sm:$0xff]
    %v256 = vld [vmem:[%s2 + $0x48] sm:$0xff]
    %v257 = vld [vmem:[%s2 + $0x50] sm:$0xff]
    %v258 = vld [vmem:[%s2 + $0x58] sm:$0xff]
    %v259 = vld [vmem:[%s2 + $0x60] sm:$0xff]
    %v260 = vld [vmem:[%s2 + $0x68] sm:$0xff]
    %v261 = vld [vmem:[%s2 + $0x70] sm:$0xff]
    %v262 = vld [vmem:[%s2 + $0x78] sm:$0xff]
    %263 = vmatprep.subr.mxu0 0.0
    %264 = vmatpush1.msra.mxu0 %v247
    %265 = vmatprep.subr.mxu0 0.0
    %266 = vmatpush1.msra.mxu0 %v248
    %267 = vmatprep.subr.mxu0 0.0
    %268 = vmatpush1.msra.mxu0 %v249
    %269 = vmatprep.subr.mxu0 0.0
    %270 = vmatpush1.msra.mxu0 %v250
    %271 = vmatprep.subr.mxu0 0.0
    %272 = vmatpush1.msra.mxu0 %v251
    %273 = vmatprep.subr.mxu0 0.0
    %274 = vmatpush1.msra.mxu0 %v252
    %275 = vmatprep.subr.mxu0 0.0
    %276 = vmatpush1.msra.mxu0 %v253
    %277 = vmatprep.subr.mxu0 0.0
    %278 = vmatpush1.msra.mxu0 %v254
    %279 = vmatprep.subr.mxu0 0.0
    %280 = vmatpush1.msra.mxu0 %v255
    %281 = vmatprep.subr.mxu0 0.0
    %282 = vmatpush1.msra.mxu0 %v256
    %283 = vmatprep.subr.mxu0 0.0
    %284 = vmatpush1.msra.mxu0 %v257
    %285 = vmatprep.subr.mxu0 0.0
    %286 = vmatpush1.msra.mxu0 %v258
    %287 = vmatprep.subr.mxu0 0.0
    %288 = vmatpush1.msra.mxu0 %v259
    %289 = vmatprep.subr.mxu0 0.0
    %290 = vmatpush1.msra.mxu0 %v260
    %291 = vmatprep.subr.mxu0 0.0
    %292 = vmatpush1.msra.mxu0 %v261
    %293 = vmatprep.subr.mxu0 0.0
    %294 = vmatpush1.msra.mxu0 %v262
    %295 = vmatprep.subr.mxu0 0.0
    %296 = vmatpush1.msra.mxu0 0.0
    %297 = vmatprep.subr.mxu0 0.0
    %298 = vmatpush1.msra.mxu0 0.0
    %299 = vmatprep.subr.mxu0 0.0
    %300 = vmatpush1.msra.mxu0 0.0
    %301 = vmatprep.subr.mxu0 0.0
    %302 = vmatpush1.msra.mxu0 0.0
    %303 = vmatprep.subr.mxu0 0.0
    %304 = vmatpush1.msra.mxu0 0.0
    %305 = vmatprep.subr.mxu0 0.0
    %306 = vmatpush1.msra.mxu0 0.0
    %307 = vmatprep.subr.mxu0 0.0
    %308 = vmatpush1.msra.mxu0 0.0
    %309 = vmatprep.subr.mxu0 0.0
    %310 = vmatpush1.msra.mxu0 0.0
    %311 = vmatprep.subr.mxu0 0.0
    %312 = vmatpush1.msra.mxu0 0.0
    %313 = vmatprep.subr.mxu0 0.0
    %314 = vmatpush1.msra.mxu0 0.0
    %315 = vmatprep.subr.mxu0 0.0
    %316 = vmatpush1.msra.mxu0 0.0
    %317 = vmatprep.subr.mxu0 0.0
    %318 = vmatpush1.msra.mxu0 0.0
    %319 = vmatprep.subr.mxu0 0.0
    %320 = vmatpush1.msra.mxu0 0.0
    %321 = vmatprep.subr.mxu0 0.0
    %322 = vmatpush1.msra.mxu0 0.0
    %323 = vmatprep.subr.mxu0 0.0
    %324 = vmatpush1.msra.mxu0 0.0
    %325 = vmatprep.subr.mxu0 0.0
    %326 = vmatpush1.msra.mxu0 0.0
    %327 = vmatprep.mubr.f32.mxu0 0.0
    %328 = vmatmul.mubr.f32.gmra.mrb[0].mxu0 %v153
    %v329 = vpop.f32.mrb[0].mxu0
    %v330 = vadd.f32 0.0, %v329
    %v331 = vpop.f32.mrb[0].mxu0
    %332 = vmatprep.mubr.f32.mxu0 0.0
    %333 = vmatmul.mubr.f32.gmra.mrb[0].mxu0 %v158
    %v334 = vpop.f32.mrb[0].mxu0
    %v335 = vadd.f32 0.0, %v334
    %v336 = vpop.f32.mrb[0].mxu0
    %337 = vmatprep.mubr.f32.mxu0 0.0
    %338 = vmatmul.mubr.f32.gmra.mrb[0].mxu0 %v163
    %v339 = vpop.f32.mrb[0].mxu0
    %v340 = vadd.f32 0.0, %v339
    %v341 = vpop.f32.mrb[0].mxu0
    %342 = vmatprep.mubr.f32.mxu0 0.0
    %343 = vmatmul.mubr.f32.gmra.mrb[0].mxu0 %v168
    %v344 = vpop.f32.mrb[0].mxu0
    %v345 = vadd.f32 0.0, %v344
    %v346 = vpop.f32.mrb[0].mxu0
    %347 = vmatprep.mubr.f32.mxu0 0.0
    %348 = vmatmul.mubr.f32.gmra.mrb[0].mxu0 %v173
    %v349 = vpop.f32.mrb[0].mxu0
    %v350 = vadd.f32 0.0, %v349
    %v351 = vpop.f32.mrb[0].mxu0
    %352 = vmatprep.mubr.f32.mxu0 0.0
    %353 = vmatmul.mubr.f32.gmra.mrb[0].mxu0 %v178
    %v354 = vpop.f32.mrb[0].mxu0
    %v355 = vadd.f32 0.0, %v354
    %v356 = vpop.f32.mrb[0].mxu0
    %357 = vmatprep.mubr.f32.mxu0 0.0
    %358 = vmatmul.mubr.f32.gmra.mrb[0].mxu0 %v183
    %v359 = vpop.f32.mrb[0].mxu0
    %v360 = vadd.f32 0.0, %v359
    %v361 = vpop.f32.mrb[0].mxu0
    %362 = vmatprep.mubr.f32.mxu0 0.0
    %363 = vmatmul.mubr.f32.gmra.mrb[0].mxu0 %v188
    %v364 = vpop.f32.mrb[0].mxu0
    %v365 = vadd.f32 0.0, %v364
    %v366 = vpop.f32.mrb[0].mxu0
    %367 = vmatprep.mubr.f32.mxu0 0.0
    %368 = vmatmul.mubr.f32.gmra.mrb[0].mxu0 %v193
    %v369 = vpop.f32.mrb[0].mxu0
    %v370 = vadd.f32 0.0, %v369
    %v371 = vpop.f32.mrb[0].mxu0
    %372 = vmatprep.mubr.f32.mxu0 0.0
    %373 = vmatmul.mubr.f32.gmra.mrb[0].mxu0 %v198
    %v374 = vpop.f32.mrb[0].mxu0
    %v375 = vadd.f32 0.0, %v374
    %v376 = vpop.f32.mrb[0].mxu0
    %377 = vmatprep.mubr.f32.mxu0 0.0
    %378 = vmatmul.mubr.f32.gmra.mrb[0].mxu0 %v203
    %v379 = vpop.f32.mrb[0].mxu0
    %v380 = vadd.f32 0.0, %v379
    %v381 = vpop.f32.mrb[0].mxu0
    %382 = vmatprep.mubr.f32.mxu0 0.0
    %383 = vmatmul.mubr.f32.gmra.mrb[0].mxu0 %v208
    %v384 = vpop.f32.mrb[0].mxu0
    %v385 = vadd.f32 0.0, %v384
    %v386 = vpop.f32.mrb[0].mxu0
    %387 = vmatprep.mubr.f32.mxu0 0.0
    %388 = vmatmul.mubr.f32.gmra.mrb[0].mxu0 %v213
    %v389 = vpop.f32.mrb[0].mxu0
    %v390 = vadd.f32 0.0, %v389
    %v391 = vpop.f32.mrb[0].mxu0
    %392 = vmatprep.mubr.f32.mxu0 0.0
    %393 = vmatmul.mubr.f32.gmra.mrb[0].mxu0 %v218
    %v394 = vpop.f32.mrb[0].mxu0
    %v395 = vadd.f32 0.0, %v394
    %v396 = vpop.f32.mrb[0].mxu0
    %397 = vmatprep.mubr.f32.mxu0 0.0
    %398 = vmatmul.mubr.f32.gmra.mrb[0].mxu0 %v223
    %v399 = vpop.f32.mrb[0].mxu0
    %v400 = vadd.f32 0.0, %v399
    %v401 = vpop.f32.mrb[0].mxu0
    %402 = vmatprep.mubr.f32.mxu0 0.0
    %403 = vmatmul.mubr.f32.gmra.mrb[0].mxu0 %v228
    %v404 = vpop.f32.mrb[0].mxu0
    %v405 = vadd.f32 0.0, %v404
    %v406 = vpop.f32.mrb[0].mxu0
    %407 = vdwg.mxu0
    %vm408 = vcmask 64512
    %409 = vst.msk [vmem:[%s4] sm:$0xff] %vm408, %v330
    %410 = vst.msk [vmem:[%s4 + $0x8] sm:$0xff] %vm408, %v335
    %411 = vst.msk [vmem:[%s4 + $0x10] sm:$0xff] %vm408, %v340
    %412 = vst.msk [vmem:[%s4 + $0x18] sm:$0xff] %vm408, %v345
    %413 = vst.msk [vmem:[%s4 + $0x20] sm:$0xff] %vm408, %v350
    %414 = vst.msk [vmem:[%s4 + $0x28] sm:$0xff] %vm408, %v355
    %415 = vst.msk [vmem:[%s4 + $0x30] sm:$0xff] %vm408, %v360
    %416 = vst.msk [vmem:[%s4 + $0x38] sm:$0xff] %vm408, %v365
    %417 = vst.msk [vmem:[%s4 + $0x40] sm:$0xff] %vm408, %v370
    %418 = vst.msk [vmem:[%s4 + $0x48] sm:$0xff] %vm408, %v375
    %419 = vst.msk [vmem:[%s4 + $0x50] sm:$0xff] %vm408, %v380
    %420 = vst.msk [vmem:[%s4 + $0x58] sm:$0xff] %vm408, %v385
    %421 = vst.msk [vmem:[%s4 + $0x60] sm:$0xff] %vm408, %v390
    %422 = vst.msk [vmem:[%s4 + $0x68] sm:$0xff] %vm408, %v395
    %423 = vst.msk [vmem:[%s4 + $0x70] sm:$0xff] %vm408, %v400
    %424 = vst.msk [vmem:[%s4 + $0x78] sm:$0xff] %vm408, %v405
    // Predicated region
    $region14: #{tpu_custom_call.1} parent=1 // pred_check
      _
    $region15: #{tpu_custom_call.1} parent=1 // pred_check_branch
      %426 = sbr.rel (0) target = $region17
    $region16: #{tpu_custom_call.1} parent=1 // pred_region
      %s428 = ssub.s32 2048, 2048
      %429 = vsyncadd [#allocation3], %s428
      %s430 = sshll.u32 [#allocation2], 4
      %s431 = int_to_ptr.vmem [resolvable:$true] %s430
      %436 = dma.vmem_to_hbm [thread:$0]  %s431, 2048, %s3, [#allocation3], 128, 128, 8
    $region17: #{tpu_custom_call.1} parent=1 // pred_fallthru
      _
    // Predicated region
    $region18: #{tpu_custom_call.1} parent=1 // pred_check
      _
    $region19: #{tpu_custom_call.1} parent=1 // pred_check_branch
      %438 = sbr.rel (0) target = $region21
    $region20: #{tpu_custom_call.1} parent=1 // pred_region
      _
    $region21: #{tpu_custom_call.1} parent=1 // pred_fallthru
      _
    // Predicated region
    $region22: #{tpu_custom_call.1} parent=1 // pred_check
      _
    $region23: #{tpu_custom_call.1} parent=1 // pred_check_branch
      %440 = sbr.rel (0) target = $region25
    $region24: #{tpu_custom_call.1} parent=1 // pred_region
      %441 = dma.done [#allocation3], 2048
    $region25: #{tpu_custom_call.1} parent=1 // pred_fallthru
      _
    // Predicated region
    $region26: #{tpu_custom_call.1} parent=1 // pred_check
      _
    $region27: #{tpu_custom_call.1} parent=1 // pred_check_branch
      %443 = sbr.rel (0) target = $region29
    $region28: #{tpu_custom_call.1} parent=1 // pred_region
      _
    $region29: #{tpu_custom_call.1} parent=1 // pred_fallthru
      _
    %444 = vsyncpa [#allocation3], 1

</llo_original>
